<compile_context>
chip_gen: v7x
topology: tpu7x:2x2x1
jax: 0.10.0
libtpu: 0.0.40
codegen_flags: <defaults>
</compile_context>

<pallas_src>
import jax
import jax.numpy as jnp
from jax import lax
from jax.experimental import pallas as pl
from jax.experimental.pallas import tpu as pltpu


def discriminator_kernel(x_ref, w1_ref, b1_ref, w2r_ref, b2_ref, o_ref):
    # x_ref:  (TB, D) f32        w1_ref: (D, H) bf16      b1_ref: (1, H) f32
    # w2r_ref:(8, H)  bf16       b2_ref: (1,)   f32 (SMEM)
    # o_ref:  (8, TB) f32        (lane-dense: batch on lanes; all 8 rows identical)

    # Linear 1 on the MXU: cast x to bf16 in VMEM (halves HBM traffic vs a
    # wrapper-side cast), f32 accumulation.
    x_bf = x_ref[...].astype(jnp.bfloat16)
    h = jnp.dot(x_bf, w1_ref[...], preferred_element_type=jnp.float32)
    h = h + b1_ref[...]
    # LeakyReLU(0.01) on the VPU.
    h = jnp.where(h > 0, h, 0.01 * h)

    # Linear 2 as (8,H) @ (TB,H)^T -> (8,TB); every row equals the true logit row.
    logit8 = lax.dot_general(
        w2r_ref[...], h.astype(jnp.bfloat16),
        dimension_numbers=(((1,), (1,)), ((), ())),
        preferred_element_type=jnp.float32,
    )
    z = logit8 + b2_ref[0]                       # (8, TB), full 8-sublane value

    # Exact sigmoid; exp on EUP, single divide — negligible in this mem-bound regime.
    o_ref[...] = 1.0 / (1.0 + jnp.exp(-z))


def _pick_tile_b(B, D):
    """Batch tile: big enough to amortize ~0.35us/grid-step, >= ~4 steps for
    large B (so v7x's 2 TensorCores both get work), and small enough that ~3
    in-flight f32 x tiles fit v5e's 16 MiB scoped-VMEM default."""
    if B <= 128:
        return B
    tb = min(512, max(128, (B // 4) // 128 * 128))
    vmem_budget = 11 * (1 << 20)          # conservative vs v5e's 16 MiB default
    while tb > 128 and 3 * tb * D * 4 > vmem_budget:
        tb -= 128
    return tb


def discriminator_forward(x, w1, b1, w2, b2, *, tile_b=None):
    """x: (B, img_dim) float32.  w1: (img_dim, H), b1: (1, H) / (H,),
    w2: (H, 1) / (H,), b2: (1, 1) / (1,) / scalar.
    Returns (B, 1) float32 sigmoid probabilities."""
    B, D = x.shape
    H = w1.shape[1]

    if tile_b is None:
        tile_b = _pick_tile_b(B, D)

    num_tiles = pl.cdiv(B, tile_b)
    Bp = num_tiles * tile_b
    # NOTE: no jnp.pad of x.  If Bp != B the last (ragged) block reads beyond B;
    # those output columns are garbage and are dropped by the [:B] slice below.

    w1_c = jnp.asarray(w1, jnp.bfloat16)                                  # (D, H)
    b1_r = jnp.asarray(b1, jnp.float32).reshape(1, H)                     # (1, H)
    # Replicate w2 across 8 rows -> sublane-aligned bf16 lhs for the 2nd matmul.
    w2_r = jnp.broadcast_to(
        jnp.asarray(w2, jnp.bfloat16).reshape(1, H), (8, H))              # (8, H)
    b2_s = jnp.asarray(b2, jnp.float32).reshape(1)                        # (1,)

    if num_tiles >= 3:
        x_spec = pl.BlockSpec((tile_b, D), lambda i: (i, 0),
                              pipeline_mode=pl.Buffered(3))
    else:
        x_spec = pl.BlockSpec((tile_b, D), lambda i: (i, 0))

    out = pl.pallas_call(
        discriminator_kernel,
        out_shape=jax.ShapeDtypeStruct((8, Bp), jnp.float32),
        grid_spec=pltpu.PrefetchScalarGridSpec(
            num_scalar_prefetch=0,
            grid=(num_tiles,),
            in_specs=[
                x_spec,                                             # x tile (pipelined)
                pl.BlockSpec((D, H), lambda i: (0, 0)),             # W1 (resident)
                pl.BlockSpec((1, H), lambda i: (0, 0)),             # b1
                pl.BlockSpec((8, H), lambda i: (0, 0)),             # W2 replicated rows
                pl.BlockSpec(memory_space=pltpu.MemorySpace.SMEM),  # b2 scalar
            ],
            out_specs=pl.BlockSpec((8, tile_b), lambda i: (0, i)),  # lane-dense slab
        ),
        compiler_params=pltpu.CompilerParams(
            dimension_semantics=("parallel",),
        ),
    )(x, w1_c, b1_r, w2_r, b2_s)

    # Layout plumbing on tiny data: row 0 of the (8, Bp) slab -> (B, 1) column.
    return out[0, :B].reshape(B, 1)


def init_params(key, img_dim, hidden=128):
    """Deterministic init mimicking nn.Linear default (uniform +/- 1/sqrt(fan_in)).
    Weights stored pre-transposed as (in, out)."""
    k1, k2, k3, k4 = jax.random.split(key, 4)
    bound1 = 1.0 / (img_dim ** 0.5)
    bound2 = 1.0 / (hidden ** 0.5)
    w1 = jax.random.uniform(k1, (img_dim, hidden), jnp.float32, -bound1, bound1)
    b1 = jax.random.uniform(k2, (1, hidden), jnp.float32, -bound1, bound1)
    w2 = jax.random.uniform(k3, (hidden, 1), jnp.float32, -bound2, bound2)
    b2 = jax.random.uniform(k4, (1, 1), jnp.float32, -bound2, bound2)
    return w1, b1, w2, b2


if __name__ == "__main__":
    key = jax.random.PRNGKey(0)
    k_x, k_p = jax.random.split(key)

    B, IMG_DIM, HIDDEN = 8, 256, 128   # small shapes consistent with Discriminator(img_dim)
    x = jax.random.normal(k_x, (B, IMG_DIM), dtype=jnp.float32)
    w1, b1, w2, b2 = init_params(k_p, IMG_DIM, hidden=HIDDEN)

    out = discriminator_forward(x, w1, b1, w2, b2)
    out = jax.block_until_ready(out)
    assert out.shape == (B, 1)

    # Plain-JAX f32 reference; kernel uses bf16 operands on the MXU (f32 accum),
    # so compare post-sigmoid probabilities with a loose tolerance.
    h_ref = x @ w1 + b1
    h_ref = jnp.where(h_ref > 0, h_ref, 0.01 * h_ref)
    ref = jax.nn.sigmoid(h_ref @ w2 + b2)
    assert jnp.allclose(out, ref, atol=2e-2), "mismatch vs reference"

    print("KERNEL_OK")
</pallas_src>

<mosaic_0001>
module attributes {stable_mosaic.version = 11 : i64} {
  func.func @discriminator_kernel(%arg0: i32, %arg1: memref<8x256xf32, #tpu.memory_space<vmem>>, %arg2: memref<256x128xbf16, #tpu.memory_space<vmem>>, %arg3: memref<1x128xf32, #tpu.memory_space<vmem>>, %arg4: memref<8x128xbf16, #tpu.memory_space<vmem>>, %arg5: memref<1xf32, #tpu.memory_space<smem>>, %arg6: memref<8x8xf32, #tpu.memory_space<vmem>>) attributes {dimension_semantics = [#tpu.dimension_semantics<parallel>], iteration_bounds = array<i64: 1>, scalar_prefetch = 0 : i64, scratch_operands = 0 : i64, tpu.core_type = #tpu.core_type<tc>, window_params = [{transform_indices = @transform_0, window_bounds = array<i64: 8, 256>}, {pipeline_mode = #tpu.pipeline_mode<synchronous>, transform_indices = @transform_1, window_bounds = array<i64: 256, 128>}, {pipeline_mode = #tpu.pipeline_mode<synchronous>, transform_indices = @transform_2, window_bounds = array<i64: 1, 128>}, {pipeline_mode = #tpu.pipeline_mode<synchronous>, transform_indices = @transform_3, window_bounds = array<i64: 8, 128>}, {transform_indices = @transform_4, window_bounds = array<i64: 1>}, {transform_indices = @transform_5, window_bounds = array<i64: 8, 8>}]} {
    %c0 = arith.constant 0 : index
    %c0_0 = arith.constant 0 : index
    %0 = vector.load %arg1[%c0, %c0_0] : memref<8x256xf32, #tpu.memory_space<vmem>>, vector<8x256xf32>
    %1 = arith.truncf %0 : vector<8x256xf32> to vector<8x256xbf16>
    %c0_1 = arith.constant 0 : index
    %c0_2 = arith.constant 0 : index
    %2 = vector.load %arg2[%c0_1, %c0_2] : memref<256x128xbf16, #tpu.memory_space<vmem>>, vector<256x128xbf16>
    %cst = arith.constant dense<0.000000e+00> : vector<8x128xf32>
    %3 = tpu.matmul %1, %2, %cst {dimension_numbers = #tpu.dot_dimension_numbers<[1], [0], [0], [1], [0, 0, 1, 1], [], []>} : vector<8x256xbf16>, vector<256x128xbf16>, vector<8x128xf32> -> vector<8x128xf32>
    %c0_3 = arith.constant 0 : index
    %c0_4 = arith.constant 0 : index
    %4 = vector.load %arg3[%c0_3, %c0_4] : memref<1x128xf32, #tpu.memory_space<vmem>>, vector<1x128xf32>
    %5 = vector.broadcast %4 : vector<1x128xf32> to vector<8x128xf32>
    %6 = arith.addf %3, %5 : vector<8x128xf32>
    %cst_5 = arith.constant 0.000000e+00 : f32
    %7 = vector.broadcast %cst_5 : f32 to vector<8x128xf32>
    %8 = arith.cmpf ogt, %6, %7 : vector<8x128xf32>
    %cst_6 = arith.constant 0.00999999977 : f32
    %9 = vector.broadcast %cst_6 : f32 to vector<8x128xf32>
    %10 = arith.mulf %9, %6 : vector<8x128xf32>
    %11 = arith.select %8, %6, %10 : vector<8x128xi1>, vector<8x128xf32>
    %c0_7 = arith.constant 0 : index
    %c0_8 = arith.constant 0 : index
    %12 = vector.load %arg4[%c0_7, %c0_8] : memref<8x128xbf16, #tpu.memory_space<vmem>>, vector<8x128xbf16>
    %13 = arith.truncf %11 : vector<8x128xf32> to vector<8x128xbf16>
    %cst_9 = arith.constant dense<0.000000e+00> : vector<8x8xf32>
    %14 = tpu.matmul %12, %13, %cst_9 {dimension_numbers = #tpu.dot_dimension_numbers<[1], [1], [0], [0], [0, 0, 1, 0], [], []>} : vector<8x128xbf16>, vector<8x128xbf16>, vector<8x8xf32> -> vector<8x8xf32>
    %c0_10 = arith.constant 0 : index
    %15 = memref.load %arg5[%c0_10] : memref<1xf32, #tpu.memory_space<smem>>
    %16 = vector.broadcast %15 : f32 to vector<8x8xf32>
    %17 = arith.addf %14, %16 : vector<8x8xf32>
    %cst_11 = arith.constant 0.000000e+00 : f32
    %18 = vector.broadcast %cst_11 : f32 to vector<8x8xf32>
    %19 = arith.subf %18, %17 : vector<8x8xf32>
    %20 = math.exp %19 : vector<8x8xf32>
    %cst_12 = arith.constant 1.000000e+00 : f32
    %21 = vector.broadcast %cst_12 : f32 to vector<8x8xf32>
    %22 = arith.addf %21, %20 : vector<8x8xf32>
    %cst_13 = arith.constant 1.000000e+00 : f32
    %23 = vector.broadcast %cst_13 : f32 to vector<8x8xf32>
    %24 = arith.divf %23, %22 : vector<8x8xf32>
    %c0_14 = arith.constant 0 : index
    %c0_15 = arith.constant 0 : index
    %25 = vector.load %arg6[%c0_14, %c0_15] : memref<8x8xf32, #tpu.memory_space<vmem>>, vector<8x8xf32>
    tpu.vector_store %arg6[%c0_14, %c0_15], %24 {strides = array<i32>} : memref<8x8xf32, #tpu.memory_space<vmem>>, vector<8x8xf32>,
    return
  }
  func.func @transform_0(%arg0: i32) -> (i32, i32) {
    %c0_i32 = arith.constant 0 : i32
    %c0_i32_0 = arith.constant 0 : i32
    return %arg0, %c0_i32 : i32, i32
  }
  func.func @transform_1(%arg0: i32) -> (i32, i32) {
    %c0_i32 = arith.constant 0 : i32
    %c0_i32_0 = arith.constant 0 : i32
    %c0_i32_1 = arith.constant 0 : i32
    return %c0_i32, %c0_i32_0 : i32, i32
  }
  func.func @transform_2(%arg0: i32) -> (i32, i32) {
    %c0_i32 = arith.constant 0 : i32
    %c0_i32_0 = arith.constant 0 : i32
    %c0_i32_1 = arith.constant 0 : i32
    return %c0_i32, %c0_i32_0 : i32, i32
  }
  func.func @transform_3(%arg0: i32) -> (i32, i32) {
    %c0_i32 = arith.constant 0 : i32
    %c0_i32_0 = arith.constant 0 : i32
    %c0_i32_1 = arith.constant 0 : i32
    return %c0_i32, %c0_i32_0 : i32, i32
  }
  func.func @transform_4(%arg0: i32) -> i32 {
    %c0_i32 = arith.constant 0 : i32
    %c0_i32_0 = arith.constant 0 : i32
    return %c0_i32 : i32
  }
  func.func @transform_5(%arg0: i32) -> (i32, i32) {
    %c0_i32 = arith.constant 0 : i32
    %c0_i32_0 = arith.constant 0 : i32
    return %c0_i32, %arg0 : i32, i32
  }
}

</mosaic_0001>

<llo_original>
// kernel: tpu_custom_call.1
$region0: #{tpu_custom_call.1}
  #allocation0 [shape = 'u32[]', space=smem, size = 0x4, offset = 0x4, fixed_abs, tag = 'smem constant byte address 0x4 - core index']
  #allocation1 [shape = 'u32[144,128]{1,0:T(1,128)}', space=vmem, size = 0x12000, scoped, tag = 'internal scratch']
  #allocation2 [shape = 'f32[1]{0:T(128)S(6)}', space=smem, size = 0x200, scoped, tag = 'scoped memory for tpu_custom_call.1']
  %s0 = inlined_call_operand.hbm [shape: f32[8,256], index: 0, kind: input, shape index: {}]
  %s1 = inlined_call_operand.hbm [shape: bf16[256,128], index: 1, kind: input, shape index: {}]
  %s2 = inlined_call_operand.vmem [shape: f32[1,128], index: 2, kind: input, shape index: {}]
  %s3 = inlined_call_operand.vmem [shape: bf16[8,128], index: 3, kind: input, shape index: {}]
  %s4 = inlined_call_operand.<no memory space> [shape: f32[1], index: 4, kind: input, shape index: {}]
  %s5 = inlined_call_operand.hbm [shape: f32[8,8], index: 5, kind: output, shape index: {}]
  %s6 = sld [smem:[#allocation0]]
  $region38: #{tpu_custom_call.1} parent=0
    _
  %s8 = ssub.s32 1, %s6
  %s9 = scalar_select 0, %s8, %s6
  %10 = sst [smem:[#allocation2]] %s4
  $region1: #{tpu_custom_call.1} parent=0
    #allocation3 [shape = 'u8[8192]{0}', space=vmem, size = 0x2000, scoped, tag = 'input window, operand 0, single buffered']
    #allocation4 [shape = 's32[1]{0}', space=sflag, size = 0x4, scoped, tag = 'scoped memory for tpu_custom_call.1']
    #allocation5 [shape = 's32[1]{0}', space=sflag, size = 0x4, scoped, tag = 'scoped memory for tpu_custom_call.1']
    #allocation6 [shape = 'u8[65536]{0}', space=vmem, size = 0x10000, scoped, tag = 'input window, operand 1, single buffered']
    #allocation7 [shape = 's32[1]{0}', space=sflag, size = 0x4, scoped, tag = 'scoped memory for tpu_custom_call.1']
    #allocation8 [shape = 'u8[4096]{0}', space=vmem, size = 0x1000, scoped, tag = 'output window, operand 0, single buffered']
    %11 = vsyncpa [#allocation4], 0
    %12 = vsyncpa [#allocation7], 0
    %13 = vsyncpa [#allocation5], 0
    // Predicated region
    $region2: #{tpu_custom_call.1} parent=1 // pred_check
      _
    $region3: #{tpu_custom_call.1} parent=1 // pred_check_branch
      %15 = sbr.rel (0) target = $region5
    $region4: #{tpu_custom_call.1} parent=1 // pred_region
      %s17 = ssub.s32 256, 256
      %18 = vsyncadd [#allocation4], %s17
      %s20 = sshll.u32 [#allocation3], 4
      %s21 = int_to_ptr.vmem [resolvable:$true] %s20
      %23 = dma.hbm_to_vmem [thread:$0]  %s0, 256, %s21, [#allocation4]
    $region5: #{tpu_custom_call.1} parent=1 // pred_fallthru
      _
    // Predicated region
    $region6: #{tpu_custom_call.1} parent=1 // pred_check
      _
    $region7: #{tpu_custom_call.1} parent=1 // pred_check_branch
      %25 = sbr.rel (0) target = $region9
    $region8: #{tpu_custom_call.1} parent=1 // pred_region
      %s27 = ssub.s32 2048, 2048
      %28 = vsyncadd [#allocation7], %s27
      %s29 = sshll.u32 [#allocation6], 4
      %s30 = int_to_ptr.vmem [resolvable:$true] %s29
      %35 = dma.hbm_to_vmem [thread:$0]  %s1, 2048, %s30, [#allocation7], 64, 64, 4
    $region9: #{tpu_custom_call.1} parent=1 // pred_fallthru
      _
    // Predicated region
    $region10: #{tpu_custom_call.1} parent=1 // pred_check
      _
    $region11: #{tpu_custom_call.1} parent=1 // pred_check_branch
      %37 = sbr.rel (0) target = $region13
    $region12: #{tpu_custom_call.1} parent=1 // pred_region
      _
    $region13: #{tpu_custom_call.1} parent=1 // pred_fallthru
      _
    // Predicated region
    $region14: #{tpu_custom_call.1} parent=1 // pred_check
      _
    $region15: #{tpu_custom_call.1} parent=1 // pred_check_branch
      %39 = sbr.rel (0) target = $region17
    $region16: #{tpu_custom_call.1} parent=1 // pred_region
      _
    $region17: #{tpu_custom_call.1} parent=1 // pred_fallthru
      _
    // Predicated region
    $region18: #{tpu_custom_call.1} parent=1 // pred_check
      _
    $region19: #{tpu_custom_call.1} parent=1 // pred_check_branch
      %41 = sbr.rel (0) target = $region21
    $region20: #{tpu_custom_call.1} parent=1 // pred_region
      _
    $region21: #{tpu_custom_call.1} parent=1 // pred_fallthru
      _
    // Predicated region
    $region22: #{tpu_custom_call.1} parent=1 // pred_check
      _
    $region23: #{tpu_custom_call.1} parent=1 // pred_check_branch
      %43 = sbr.rel (0) target = $region25
    $region24: #{tpu_custom_call.1} parent=1 // pred_region
      %44 = dma.done [#allocation4], 256
    $region25: #{tpu_custom_call.1} parent=1 // pred_fallthru
      _
    // Predicated region
    $region26: #{tpu_custom_call.1} parent=1 // pred_check
      _
    $region27: #{tpu_custom_call.1} parent=1 // pred_check_branch
      %46 = sbr.rel (0) target = $region29
    $region28: #{tpu_custom_call.1} parent=1 // pred_region
      %47 = dma.done [#allocation7], 2048
    $region29: #{tpu_custom_call.1} parent=1 // pred_fallthru
      _
    %v49 = vld [vmem:[#allocation3] sm:$0xff]
    %v50 = vld [vmem:[#allocation3 + $0x8] sm:$0xff]
    %v51 = vpack.c.bf16 %v49, %v49
    %v52 = vpack.c.bf16 %v50, %v50
    %v53 = vld [vmem:[#allocation6] sm:$0xf]
    %v54 = vld [vmem:[#allocation6 + $0x4] sm:$0xf]
    %v55 = vld [vmem:[#allocation6 + $0x8] sm:$0xf]
    %v56 = vld [vmem:[#allocation6 + $0xc] sm:$0xf]
    %v57 = vld [vmem:[#allocation6 + $0x10] sm:$0xf]
    %v58 = vld [vmem:[#allocation6 + $0x14] sm:$0xf]
    %v59 = vld [vmem:[#allocation6 + $0x18] sm:$0xf]
    %v60 = vld [vmem:[#allocation6 + $0x1c] sm:$0xf]
    %v61 = vld [vmem:[#allocation6 + $0x20] sm:$0xf]
    %v62 = vld [vmem:[#allocation6 + $0x24] sm:$0xf]
    %v63 = vld [vmem:[#allocation6 + $0x28] sm:$0xf]
    %v64 = vld [vmem:[#allocation6 + $0x2c] sm:$0xf]
    %v65 = vld [vmem:[#allocation6 + $0x30] sm:$0xf]
    %v66 = vld [vmem:[#allocation6 + $0x34] sm:$0xf]
    %v67 = vld [vmem:[#allocation6 + $0x38] sm:$0xf]
    %v68 = vld [vmem:[#allocation6 + $0x3c] sm:$0xf]
    %v69 = vld [vmem:[#allocation6 + $0x40] sm:$0xf]
    %v70 = vld [vmem:[#allocation6 + $0x44] sm:$0xf]
    %v71 = vld [vmem:[#allocation6 + $0x48] sm:$0xf]
    %v72 = vld [vmem:[#allocation6 + $0x4c] sm:$0xf]
    %v73 = vld [vmem:[#allocation6 + $0x50] sm:$0xf]
    %v74 = vld [vmem:[#allocation6 + $0x54] sm:$0xf]
    %v75 = vld [vmem:[#allocation6 + $0x58] sm:$0xf]
    %v76 = vld [vmem:[#allocation6 + $0x5c] sm:$0xf]
    %v77 = vld [vmem:[#allocation6 + $0x60] sm:$0xf]
    %v78 = vld [vmem:[#allocation6 + $0x64] sm:$0xf]
    %v79 = vld [vmem:[#allocation6 + $0x68] sm:$0xf]
    %v80 = vld [vmem:[#allocation6 + $0x6c] sm:$0xf]
    %v81 = vld [vmem:[#allocation6 + $0x70] sm:$0xf]
    %v82 = vld [vmem:[#allocation6 + $0x74] sm:$0xf]
    %v83 = vld [vmem:[#allocation6 + $0x78] sm:$0xf]
    %v84 = vld [vmem:[#allocation6 + $0x7c] sm:$0xf]
    %v85 = vld [vmem:[%s2] sm:$0x1]
    %v87 = vlaneseq
    %v88 = vshrl.u32 %v87, 7
    %v89 = vsub.s32 0, %v88
    %v90 = vrot.slane %v85, %v89
    %v124 = vunpack.c.l.b16 %v53
    %v125 = vunpack.c.l.b16 %v54
    %v126 = vunpack.c.l.b16 %v55
    %v127 = vunpack.c.l.b16 %v56
    %v128 = vunpack.c.l.b16 %v57
    %v129 = vunpack.c.l.b16 %v58
    %v130 = vunpack.c.l.b16 %v59
    %v131 = vunpack.c.l.b16 %v60
    %v132 = vunpack.c.l.b16 %v61
    %v133 = vunpack.c.l.b16 %v62
    %v134 = vunpack.c.l.b16 %v63
    %v135 = vunpack.c.l.b16 %v64
    %v136 = vunpack.c.l.b16 %v65
    %v137 = vunpack.c.l.b16 %v66
    %v138 = vunpack.c.l.b16 %v67
    %v139 = vunpack.c.l.b16 %v68
    %v140 = vunpack.c.l.b16 %v69
    %v141 = vunpack.c.l.b16 %v70
    %v142 = vunpack.c.l.b16 %v71
    %v143 = vunpack.c.l.b16 %v72
    %v144 = vunpack.c.l.b16 %v73
    %v145 = vunpack.c.l.b16 %v74
    %v146 = vunpack.c.l.b16 %v75
    %v147 = vunpack.c.l.b16 %v76
    %v148 = vunpack.c.l.b16 %v77
    %v149 = vunpack.c.l.b16 %v78
    %v150 = vunpack.c.l.b16 %v79
    %v151 = vunpack.c.l.b16 %v80
    %v152 = vunpack.c.l.b16 %v81
    %v153 = vunpack.c.l.b16 %v82
    %v154 = vunpack.c.l.b16 %v83
    %v155 = vunpack.c.l.b16 %v84
    %v156 = vpack.c.b16 %v125, %v124
    %v157 = vpack.c.b16 %v127, %v126
    %v158 = vpack.c.b16 %v129, %v128
    %v159 = vpack.c.b16 %v131, %v130
    %v160 = vpack.c.b16 %v133, %v132
    %v161 = vpack.c.b16 %v135, %v134
    %v162 = vpack.c.b16 %v137, %v136
    %v163 = vpack.c.b16 %v139, %v138
    %v164 = vpack.c.b16 %v141, %v140
    %v165 = vpack.c.b16 %v143, %v142
    %v166 = vpack.c.b16 %v145, %v144
    %v167 = vpack.c.b16 %v147, %v146
    %v168 = vpack.c.b16 %v149, %v148
    %v169 = vpack.c.b16 %v151, %v150
    %v170 = vpack.c.b16 %v153, %v152
    %v171 = vpack.c.b16 %v155, %v154
    %188 = vmatprep.subr.bf16.mxu0 0
    %189 = vmatpush1.bf16.msra.mxu0 %v156
    %190 = vmatprep.subr.bf16.mxu0 0
    %191 = vmatpush1.bf16.msra.mxu0 %v157
    %192 = vmatprep.subr.bf16.mxu0 0
    %193 = vmatpush1.bf16.msra.mxu0 %v158
    %194 = vmatprep.subr.bf16.mxu0 0
    %195 = vmatpush1.bf16.msra.mxu0 %v159
    %196 = vmatprep.subr.bf16.mxu0 0
    %197 = vmatpush1.bf16.msra.mxu0 %v160
    %198 = vmatprep.subr.bf16.mxu0 0
    %199 = vmatpush1.bf16.msra.mxu0 %v161
    %200 = vmatprep.subr.bf16.mxu0 0
    %201 = vmatpush1.bf16.msra.mxu0 %v162
    %202 = vmatprep.subr.bf16.mxu0 0
    %203 = vmatpush1.bf16.msra.mxu0 %v163
    %204 = vmatprep.subr.bf16.mxu0 0
    %205 = vmatpush1.bf16.msra.mxu0 %v164
    %206 = vmatprep.subr.bf16.mxu0 0
    %207 = vmatpush1.bf16.msra.mxu0 %v165
    %208 = vmatprep.subr.bf16.mxu0 0
    %209 = vmatpush1.bf16.msra.mxu0 %v166
    %210 = vmatprep.subr.bf16.mxu0 0
    %211 = vmatpush1.bf16.msra.mxu0 %v167
    %212 = vmatprep.subr.bf16.mxu0 0
    %213 = vmatpush1.bf16.msra.mxu0 %v168
    %214 = vmatprep.subr.bf16.mxu0 0
    %215 = vmatpush1.bf16.msra.mxu0 %v169
    %216 = vmatprep.subr.bf16.mxu0 0
    %217 = vmatpush1.bf16.msra.mxu0 %v170
    %218 = vmatprep.subr.bf16.mxu0 0
    %219 = vmatpush1.bf16.msra.mxu0 %v171
    %220 = vmatprep.mubr.bf16.mxu0 %v52
    %221 = vmatmul.mubr.bf16.gmra.mrb[0].mxu0 %v51
    %v222 = vpop.f32.mrb[0].mxu0
    %v223 = vadd.f32 %v90, %v222
    %v224 = vpop.f32.mrb[0].mxu0
    %v225 = vpop.f32.mrb[0].mxu0
    %v226 = vpop.f32.mrb[0].mxu0
    %227 = vdwg.mxu0
    %vm228 = vcmp.gt.f32.partialorder %v223, 0.0
    %v229 = vmul.f32 %v223, 0.01
    %v230 = vsel %vm228, %v223, %v229
    %v231 = vld [vmem:[%s3] sm:$0xf]
    %v232 = vpack.c.bf16 %v230, %v230
    %s233 = sld [smem:[#allocation2]]
    %v234 = vstv %s233
    %235 = vmatprep.subr.bf16.mxu0 0
    %236 = vmatpush1.bf16.xpose.msra.mxu0 %v232
    %237 = vmatprep.subr.bf16.mxu0 0
    %238 = vmatpush1.bf16.xpose.msra.mxu0 0
    %239 = vmatprep.subr.bf16.mxu0 0
    %240 = vmatpush1.bf16.xpose.msra.mxu0 0
    %241 = vmatprep.subr.bf16.mxu0 0
    %242 = vmatpush1.bf16.xpose.msra.mxu0 0
    %243 = vmatprep.subr.bf16.mxu0 0
    %244 = vmatpush1.bf16.xpose.msra.mxu0 0
    %245 = vmatprep.subr.bf16.mxu0 0
    %246 = vmatpush1.bf16.xpose.msra.mxu0 0
    %247 = vmatprep.subr.bf16.mxu0 0
    %248 = vmatpush1.bf16.xpose.msra.mxu0 0
    %249 = vmatprep.subr.bf16.mxu0 0
    %250 = vmatpush1.bf16.xpose.msra.mxu0 0
    %251 = vmatprep.subr.bf16.mxu0 0
    %252 = vmatpush1.bf16.xpose.msra.mxu0 0
    %253 = vmatprep.subr.bf16.mxu0 0
    %254 = vmatpush1.bf16.xpose.msra.mxu0 0
    %255 = vmatprep.subr.bf16.mxu0 0
    %256 = vmatpush1.bf16.xpose.msra.mxu0 0
    %257 = vmatprep.subr.bf16.mxu0 0
    %258 = vmatpush1.bf16.xpose.msra.mxu0 0
    %259 = vmatprep.subr.bf16.mxu0 0
    %260 = vmatpush1.bf16.xpose.msra.mxu0 0
    %261 = vmatprep.subr.bf16.mxu0 0
    %262 = vmatpush1.bf16.xpose.msra.mxu0 0
    %263 = vmatprep.subr.bf16.mxu0 0
    %264 = vmatpush1.bf16.xpose.msra.mxu0 0
    %265 = vmatprep.subr.bf16.mxu0 0
    %266 = vmatpush1.bf16.xpose.msra.mxu0 0
    %267 = vmatprep.mubr.bf16.mxu0 0
    %268 = vmatmul.mubr.bf16.gmra.mrb[0].mxu0 %v231
    %v269 = vpop.f32.mrb[0].mxu0
    %v270 = vadd.f32 %v234, %v269
    %v271 = vpop.f32.mrb[0].mxu0
    %v272 = vpop.f32.mrb[0].mxu0
    %v273 = vpop.f32.mrb[0].mxu0
    %274 = vdwg.mxu0
    %v275 = vsub.f32 0.0, %v270
    %v276 = vmul.f32 %v275, 1.442695
    %v277 = vpow.pop %v276
    %v278 = vadd.f32 %v277, 1.0
    %v279 = vrcp.pop %v278
    %v280 = vmul.f32 1.0, %v279
    %vm281 = vcmask 64512
    %282 = vst.msk [vmem:[#allocation8] sm:$0xff] %vm281, %v280
    // Predicated region
    $region30: #{tpu_custom_call.1} parent=1 // pred_check
      _
    $region31: #{tpu_custom_call.1} parent=1 // pred_check_branch
      %284 = sbr.rel (0) target = $region33
    $region32: #{tpu_custom_call.1} parent=1 // pred_region
      %s286 = ssub.s32 128, 128
      %287 = vsyncadd [#allocation5], %s286
      %s289 = sshll.u32 [#allocation8], 4
      %s290 = int_to_ptr.vmem [resolvable:$true] %s289
      %292 = dma.vmem_to_hbm [thread:$0]  %s290, 128, %s5, [#allocation5]
    $region33: #{tpu_custom_call.1} parent=1 // pred_fallthru
      _
    // Predicated region
    $region34: #{tpu_custom_call.1} parent=1 // pred_check
      _
    $region35: #{tpu_custom_call.1} parent=1 // pred_check_branch
      %294 = sbr.rel (0) target = $region37
    $region36: #{tpu_custom_call.1} parent=1 // pred_region
      %295 = dma.done [#allocation5], 128
    $region37: #{tpu_custom_call.1} parent=1 // pred_fallthru
      _
    %296 = vsyncpa [#allocation4], 1
    %297 = vsyncpa [#allocation7], 1
    %298 = vsyncpa [#allocation5], 1

</llo_original>
